<compile_context>
chip_gen: v6e
topology: v6e:2x2x1
jax: 0.10.0
libtpu: 0.0.40
codegen_flags: <defaults>
</compile_context>

<pallas_src>
import jax
import jax.numpy as jnp
from jax.experimental import pallas as pl
from jax.experimental.pallas import tpu as pltpu


def modulate_kernel(gamma_ref, beta_ref, x_ref, o_ref):
    # gamma_ref / beta_ref: (1, C, 1) block (per-batch modulation, lane-broadcast)
    # x_ref / o_ref:        (1, C, hw_tile) block for the current (batch, tile) step
    o_ref[...] = (x_ref[...] * gamma_ref[...] + beta_ref[...]).astype(o_ref.dtype)


def _choose_hw_tile(hw, c, itemsize, budget_bytes=8 << 20):
    """Lane-dense spatial tile: a multiple of 128 (<= hw) sized against budget_bytes.

    If hw <= 128 the whole plane is a single full-extent block (always legal)."""
    if hw <= 128:
        return hw
    max_by_budget = max(128, ((budget_bytes // (c * itemsize)) // 128) * 128)
    hw_floor128 = (hw // 128) * 128
    return min(max_by_budget, hw_floor128)


def affine_forward(x, y, params):
    """x: (B, C, H, W); y: (B, cond) or (cond,); params in PyTorch Linear layout."""
    w1g, b1g, w2g, b2g, w1b, b1b, w2b, b2b = params
    if y.ndim == 1:
        y = y[None, :]
    B, C, H, W = x.shape
    F = w1g.shape[0]                              # PyTorch Linear stores (out, in)
    assert F == C, (F, C)

    # --- gamma/beta MLP hoisted out of the kernel (tiny; plain XLA) -------------
    y32 = y.astype(jnp.float32)
    hg = jnp.maximum(y32 @ w1g.T.astype(jnp.float32) + b1g.astype(jnp.float32), 0.0)
    gamma = hg @ w2g.T.astype(jnp.float32) + b2g.astype(jnp.float32)           # (B, C)
    hb = jnp.maximum(y32 @ w1b.T.astype(jnp.float32) + b1b.astype(jnp.float32), 0.0)
    beta = hb @ w2b.T.astype(jnp.float32) + b2b.astype(jnp.float32)            # (B, C)

    # Cast the per-channel scalars to the streaming dtype once (halves VALU/vreg
    # pressure for bf16 inputs on v6e/v7x; a no-op for f32).
    gamma3 = gamma.astype(x.dtype).reshape(B, C, 1)
    beta3 = beta.astype(x.dtype).reshape(B, C, 1)

    # --- memory-bound modulation kernel -----------------------------------------
    HW = H * W
    x3 = x.reshape(B, C, HW)                      # lane axis = H*W (lane-dense)
    hw_tile = _choose_hw_tile(HW, C, x.dtype.itemsize)
    n_hw = pl.cdiv(HW, hw_tile)

    pin_bc = lambda b, s: (b, 0, 0)               # gamma/beta: re-fetch only when b changes
    cost = pl.CostEstimate(
        flops=2 * B * C * HW,
        transcendentals=0,
        bytes_accessed=2 * B * C * HW * x.dtype.itemsize
        + 2 * B * C * x.dtype.itemsize,
    )

    out = pl.pallas_call(
        modulate_kernel,
        out_shape=jax.ShapeDtypeStruct((B, C, HW), x.dtype),
        grid_spec=pltpu.PrefetchScalarGridSpec(
            num_scalar_prefetch=0,
            grid=(B, n_hw),
            in_specs=[
                pl.BlockSpec((1, C, 1), pin_bc),                           # gamma
                pl.BlockSpec((1, C, 1), pin_bc),                           # beta
                pl.BlockSpec((1, C, hw_tile), lambda b, s: (b, 0, s)),     # x tile
            ],
            out_specs=pl.BlockSpec((1, C, hw_tile), lambda b, s: (b, 0, s)),
        ),
        compiler_params=pltpu.CompilerParams(
            dimension_semantics=("parallel", "parallel"),
            vmem_limit_bytes=48 << 20,
        ),
        cost_estimate=cost,
    )(gamma3, beta3, x3)
    return out.reshape(B, C, H, W)


def affine_ref(x, y, params):
    """Pure-JAX mirror of Affine.forward (PyTorch-layout params), for validation."""
    w1g, b1g, w2g, b2g, w1b, b1b, w2b, b2b = params
    if y.ndim == 1:
        y = y[None, :]
    hg = jnp.maximum(y @ w1g.T + b1g, 0.0)
    gamma = hg @ w2g.T + b2g
    hb = jnp.maximum(y @ w1b.T + b1b, 0.0)
    beta = hb @ w2b.T + b2b
    return gamma[:, :, None, None] * x + beta[:, :, None, None]


def _make_params(key, cond_dim, num_features):
    ks = jax.random.split(key, 8)
    return (
        0.1 * jax.random.normal(ks[0], (num_features, cond_dim), jnp.float32),      # fc_gamma.linear1.weight
        0.1 * jax.random.normal(ks[1], (num_features,), jnp.float32),               # fc_gamma.linear1.bias
        0.1 * jax.random.normal(ks[2], (num_features, num_features), jnp.float32),  # fc_gamma.linear2.weight
        0.1 * jax.random.normal(ks[3], (num_features,), jnp.float32),               # fc_gamma.linear2.bias
        0.1 * jax.random.normal(ks[4], (num_features, cond_dim), jnp.float32),      # fc_beta.linear1.weight
        0.1 * jax.random.normal(ks[5], (num_features,), jnp.float32),               # fc_beta.linear1.bias
        0.1 * jax.random.normal(ks[6], (num_features, num_features), jnp.float32),  # fc_beta.linear2.weight
        0.1 * jax.random.normal(ks[7], (num_features,), jnp.float32),               # fc_beta.linear2.bias
    )


if __name__ == "__main__":
    key = jax.random.PRNGKey(0)

    # --- main case: B=2, cond=32, C=32, 16x16 spatial ---------------------------
    B, cond_dim, num_features, H, W = 2, 32, 32, 16, 16
    k0, k1, k2, k3, k4 = jax.random.split(key, 5)

    x = jax.random.normal(k0, (B, num_features, H, W), jnp.float32)
    y = jax.random.normal(k1, (B, cond_dim), jnp.float32)
    params = _make_params(k2, cond_dim, num_features)

    out = affine_forward(x, y, params)
    jax.block_until_ready(out)
    ref = affine_ref(x, y, params)
    assert out.shape == (B, num_features, H, W), out.shape
    assert jnp.allclose(out, ref, rtol=1e-4, atol=1e-4), float(jnp.max(jnp.abs(out - ref)))

    # --- module's _initialize(): linear2 W = 0, gamma bias = 1, beta bias = 0 => out == x
    params_init = (params[0], params[1],
                   jnp.zeros((num_features, num_features), jnp.float32),
                   jnp.ones((num_features,), jnp.float32),
                   params[4], params[5],
                   jnp.zeros((num_features, num_features), jnp.float32),
                   jnp.zeros((num_features,), jnp.float32))
    out_init = affine_forward(x, y, params_init)
    jax.block_until_ready(out_init)
    assert jnp.allclose(out_init, x, rtol=1e-5, atol=1e-5)

    # --- ragged spatial case (HW not a multiple of 128 -> cdiv grid + masked last tile)
    C2, cond2, H2, W2 = 16, 8, 17, 9            # HW = 153
    x2 = jax.random.normal(k3, (B, C2, H2, W2), jnp.float32)
    y2 = jax.random.normal(k4, (B, cond2), jnp.float32)
    params2 = _make_params(jax.random.PRNGKey(1), cond2, C2)
    out2 = affine_forward(x2, y2, params2)
    jax.block_until_ready(out2)
    ref2 = affine_ref(x2, y2, params2)
    assert out2.shape == (B, C2, H2, W2), out2.shape
    assert jnp.allclose(out2, ref2, rtol=1e-4, atol=1e-4), float(jnp.max(jnp.abs(out2 - ref2)))

    print("KERNEL_OK")
</pallas_src>

<mosaic_0001>
module attributes {stable_mosaic.version = 11 : i64} {
  func.func @modulate_kernel(%arg0: i32, %arg1: i32, %arg2: memref<1x32x1xf32, #tpu.memory_space<vmem>>, %arg3: memref<1x32x1xf32, #tpu.memory_space<vmem>>, %arg4: memref<1x32x256xf32, #tpu.memory_space<vmem>>, %arg5: memref<1x32x256xf32, #tpu.memory_space<vmem>>) attributes {dimension_semantics = [#tpu.dimension_semantics<parallel>, #tpu.dimension_semantics<parallel>], iteration_bounds = array<i64: 2, 1>, scalar_prefetch = 0 : i64, scratch_operands = 0 : i64, tpu.core_type = #tpu.core_type<tc>, window_params = [{transform_indices = @transform_0, window_bounds = array<i64: 1, 32, 1>}, {transform_indices = @transform_1, window_bounds = array<i64: 1, 32, 1>}, {transform_indices = @transform_2, window_bounds = array<i64: 1, 32, 256>}, {transform_indices = @transform_3, window_bounds = array<i64: 1, 32, 256>}]} {
    %c0 = arith.constant 0 : index
    %c0_0 = arith.constant 0 : index
    %c0_1 = arith.constant 0 : index
    %0 = vector.load %arg4[%c0, %c0_0, %c0_1] : memref<1x32x256xf32, #tpu.memory_space<vmem>>, vector<1x32x256xf32>
    %c0_2 = arith.constant 0 : index
    %c0_3 = arith.constant 0 : index
    %c0_4 = arith.constant 0 : index
    %1 = vector.load %arg2[%c0_2, %c0_3, %c0_4] : memref<1x32x1xf32, #tpu.memory_space<vmem>>, vector<1x32x1xf32>
    %2 = vector.broadcast %1 : vector<1x32x1xf32> to vector<1x32x256xf32>
    %3 = arith.mulf %0, %2 : vector<1x32x256xf32>
    %c0_5 = arith.constant 0 : index
    %c0_6 = arith.constant 0 : index
    %c0_7 = arith.constant 0 : index
    %4 = vector.load %arg3[%c0_5, %c0_6, %c0_7] : memref<1x32x1xf32, #tpu.memory_space<vmem>>, vector<1x32x1xf32>
    %5 = vector.broadcast %4 : vector<1x32x1xf32> to vector<1x32x256xf32>
    %6 = arith.addf %3, %5 : vector<1x32x256xf32>
    %c0_8 = arith.constant 0 : index
    %c0_9 = arith.constant 0 : index
    %c0_10 = arith.constant 0 : index
    %7 = vector.load %arg5[%c0_8, %c0_9, %c0_10] : memref<1x32x256xf32, #tpu.memory_space<vmem>>, vector<1x32x256xf32>
    tpu.vector_store %arg5[%c0_8, %c0_9, %c0_10], %6 {strides = array<i32>} : memref<1x32x256xf32, #tpu.memory_space<vmem>>, vector<1x32x256xf32>,
    return
  }
  func.func @transform_0(%arg0: i32, %arg1: i32) -> (i32, i32, i32) {
    %c0_i32 = arith.constant 0 : i32
    %c0_i32_0 = arith.constant 0 : i32
    %c0_i32_1 = arith.constant 0 : i32
    return %arg0, %c0_i32, %c0_i32_0 : i32, i32, i32
  }
  func.func @transform_1(%arg0: i32, %arg1: i32) -> (i32, i32, i32) {
    %c0_i32 = arith.constant 0 : i32
    %c0_i32_0 = arith.constant 0 : i32
    %c0_i32_1 = arith.constant 0 : i32
    return %arg0, %c0_i32, %c0_i32_0 : i32, i32, i32
  }
  func.func @transform_2(%arg0: i32, %arg1: i32) -> (i32, i32, i32) {
    %c0_i32 = arith.constant 0 : i32
    %c0_i32_0 = arith.constant 0 : i32
    return %arg0, %c0_i32, %arg1 : i32, i32, i32
  }
  func.func @transform_3(%arg0: i32, %arg1: i32) -> (i32, i32, i32) {
    %c0_i32 = arith.constant 0 : i32
    %c0_i32_0 = arith.constant 0 : i32
    return %arg0, %c0_i32, %arg1 : i32, i32, i32
  }
}

</mosaic_0001>

<llo_original>
// kernel: tpu_custom_call.1
$region0: #{tpu_custom_call.1}
  #allocation0 [shape = 'u32[]', space=smem, size = 0x4, offset = 0x4, fixed_abs, tag = 'smem constant byte address 0x4 - core index']
  #allocation1 [shape = 'u32[144,128]{1,0:T(1,128)}', space=vmem, size = 0x12000, scoped, tag = 'internal scratch']
  %s0 = inlined_call_operand.vmem [shape: f32[2,32,1], index: 0, kind: input, shape index: {}]
  %s1 = inlined_call_operand.vmem [shape: f32[2,32,1], index: 1, kind: input, shape index: {}]
  %s2 = inlined_call_operand.vmem [shape: f32[2,32,256], index: 2, kind: input, shape index: {}]
  %s3 = inlined_call_operand.hbm [shape: f32[2,32,256], index: 3, kind: output, shape index: {}]
  %s4 = sld [smem:[#allocation0]]
  $region45: #{tpu_custom_call.1} parent=0
    _
  %s6 = ssub.s32 1, %s4
  %s7 = scalar_select 0, %s6, %s4
  $region1: #{tpu_custom_call.1} parent=0
    #allocation2 [shape = 'u8[65536]{0}', space=vmem, size = 0x10000, scoped, tag = 'output window, operand 0']
    #allocation3 [shape = 's32[2]{0}', space=sflag, size = 0x8, scoped, tag = 'scoped memory for tpu_custom_call.1']
    %8 = vsyncpa [#allocation3], 0
    %s9 = scalar_lea.sflag [#allocation3], 1
    %10 = vsyncpa %s9, 0
    loop: start=0, step=1, limit=4
    $region2: #{tpu_custom_call.1} parent=1 // loop_pre_header
      _
    $region3: #{tpu_custom_call.1} parent=1 // loop_header
      %s12 = sphi 0, %s16
      %p13 = scmp.ge.s32.totalorder %s12, 4
      %s19 = sphi 0, %s31
      %s20 = sphi 0, %s27
      %s21 = sphi 0, %s19
      %s22 = sphi 0, %s20
      %s23 = sphi 0, %s21
      %s24 = sphi 0, %s22
      %s34 = sphi 0, %s36
      %s37 = sphi 0, %s34
      %s38 = sphi 0, %s37
      %s54 = sphi 0, %s38
      %s60 = sphi 0, %s62
      %s63 = sphi 0, %s60
      %s64 = sphi 0, %s63
      %s80 = sphi 0, %s64
      %s88 = sphi 0, %s90
      %s91 = sphi 0, %s88
      %s92 = sphi 0, %s91
      %s108 = sphi 0, %s92
      %s116 = sphi 0, %s118
      %s119 = sphi 0, %s116
      %s120 = sphi 0, %s119
      %s136 = sphi 0, %s120
    $region4: #{tpu_custom_call.1} parent=1 // loop_header_branch
      %15 = sbr.rel (%p13) target = $region8
    $region5: #{tpu_custom_call.1} parent=1 // loop_body
      %s17 = ssub.s32 %s12, 1
      %s18 = ssub.s32 %s12, 2
      %s25 = sadd.s32 1, %s20
      %p26 = scmp.ge.s32.totalorder %s25, 1
      %s27 = scalar_select %p26, 0, %s25
      %s28 = sadd.s32 1, %s19
      %s29 = scalar_select %p26, %s28, %s19
      %p30 = scmp.ge.s32.totalorder %s29, 2
      %s31 = scalar_select %p30, 0, %s29
      %s32 = ssub.s32 %s19, %s31
      %p33 = scmp.eq.s32.totalorder %s32, 0
      %s35 = sadd.s32 %s34, 1
      %s36 = scalar_select %p33, %s34, %s35
      %p39 = pneg %p33
      %p40 = scmp.eq.s32.totalorder %s12, 1
      %p41 = por %p39, %p40
      %p42 = scmp.ne.s32.totalorder %s34, %s37
      %p43 = scmp.eq.s32.totalorder %s12, 0
      %p44 = por %p42, %p43
      %p45 = scmp.ne.s32.totalorder %s34, %s37
      %p46 = scmp.eq.s32.totalorder %s17, 1
      %p47 = por %p45, %p46
      %p48 = scmp.ne.s32.totalorder %s37, %s38
      %p49 = scmp.eq.s32.totalorder %s17, 0
      %p50 = por %p48, %p49
      %p51 = scmp.ne.s32.totalorder %s37, %s38
      %p52 = scmp.eq.s32.totalorder %s18, 1
      %p53 = por %p51, %p52
      %p55 = scmp.ne.s32.totalorder %s38, %s54
      %p56 = scmp.eq.s32.totalorder %s18, 0
      %p57 = por %p55, %p56
      %s58 = ssub.s32 %s19, %s31
      %p59 = scmp.eq.s32.totalorder %s58, 0
      %s61 = sadd.s32 %s60, 1
      %s62 = scalar_select %p59, %s60, %s61
      %p65 = pneg %p59
      %p66 = scmp.eq.s32.totalorder %s12, 1
      %p67 = por %p65, %p66
      %p68 = scmp.ne.s32.totalorder %s60, %s63
      %p69 = scmp.eq.s32.totalorder %s12, 0
      %p70 = por %p68, %p69
      %p71 = scmp.ne.s32.totalorder %s60, %s63
      %p72 = scmp.eq.s32.totalorder %s17, 1
      %p73 = por %p71, %p72
      %p74 = scmp.ne.s32.totalorder %s63, %s64
      %p75 = scmp.eq.s32.totalorder %s17, 0
      %p76 = por %p74, %p75
      %p77 = scmp.ne.s32.totalorder %s63, %s64
      %p78 = scmp.eq.s32.totalorder %s18, 1
      %p79 = por %p77, %p78
      %p81 = scmp.ne.s32.totalorder %s64, %s80
      %p82 = scmp.eq.s32.totalorder %s18, 0
      %p83 = por %p81, %p82
      %s84 = ssub.s32 %s19, %s31
      %s85 = ssub.s32 %s20, %s27
      %s86 = sor.u32 %s84, %s85
      %p87 = scmp.eq.s32.totalorder %s86, 0
      %s89 = sadd.s32 %s88, 1
      %s90 = scalar_select %p87, %s88, %s89
      %p93 = pneg %p87
      %p94 = scmp.eq.s32.totalorder %s12, 1
      %p95 = por %p93, %p94
      %p96 = scmp.ne.s32.totalorder %s88, %s91
      %p97 = scmp.eq.s32.totalorder %s12, 0
      %p98 = por %p96, %p97
      %p99 = scmp.ne.s32.totalorder %s88, %s91
      %p100 = scmp.eq.s32.totalorder %s17, 1
      %p101 = por %p99, %p100
      %p102 = scmp.ne.s32.totalorder %s91, %s92
      %p103 = scmp.eq.s32.totalorder %s17, 0
      %p104 = por %p102, %p103
      %p105 = scmp.ne.s32.totalorder %s91, %s92
      %p106 = scmp.eq.s32.totalorder %s18, 1
      %p107 = por %p105, %p106
      %p109 = scmp.ne.s32.totalorder %s92, %s108
      %p110 = scmp.eq.s32.totalorder %s18, 0
      %p111 = por %p109, %p110
      %s112 = ssub.s32 %s19, %s31
      %s113 = ssub.s32 %s20, %s27
      %s114 = sor.u32 %s112, %s113
      %p115 = scmp.eq.s32.totalorder %s114, 0
      %s117 = sadd.s32 %s116, 1
      %s118 = scalar_select %p115, %s116, %s117
      %p121 = pneg %p115
      %p122 = scmp.eq.s32.totalorder %s12, 1
      %p123 = por %p121, %p122
      %p124 = scmp.ne.s32.totalorder %s116, %s119
      %p125 = scmp.eq.s32.totalorder %s12, 0
      %p126 = por %p124, %p125
      %p127 = scmp.ne.s32.totalorder %s116, %s119
      %p128 = scmp.eq.s32.totalorder %s17, 1
      %p129 = por %p127, %p128
      %p130 = scmp.ne.s32.totalorder %s119, %s120
      %p131 = scmp.eq.s32.totalorder %s17, 0
      %p132 = por %p130, %p131
      %p133 = scmp.ne.s32.totalorder %s119, %s120
      %p134 = scmp.eq.s32.totalorder %s18, 1
      %p135 = por %p133, %p134
      %p137 = scmp.ne.s32.totalorder %s120, %s136
      %p138 = scmp.eq.s32.totalorder %s18, 0
      %p139 = por %p137, %p138
      %p140 = scmp.le.s32.totalorder 1, %s12
      %p141 = scmp.lt.s32.totalorder %s12, 3
      %p142 = pnand %p140, %p141
      %p143 = pneg %p142
      // Predicated region
      $region9: #{tpu_custom_call.1} parent=5 // pred_check
        _
      $region10: #{tpu_custom_call.1} parent=5 // pred_check_branch
        %145 = sbr.rel (%p142) target = $region12
      $region11: #{tpu_custom_call.1} parent=5 // pred_region
        %s146 = ssub.s32 %s12, 1
      $region12: #{tpu_custom_call.1} parent=5 // pred_fallthru
        _
      %p147 = scmp.lt.s32.totalorder %s12, 2
      // Predicated region
      $region13: #{tpu_custom_call.1} parent=5 // pred_check
        %p148 = pneg %p147
      $region14: #{tpu_custom_call.1} parent=5 // pred_check_branch
        %150 = sbr.rel (%p148) target = $region16
      $region15: #{tpu_custom_call.1} parent=5 // pred_region
        // Predicated region
        $region17: #{tpu_custom_call.1} parent=15 // pred_check
          %p151 = pneg %p44
        $region18: #{tpu_custom_call.1} parent=15 // pred_check_branch
          %153 = sbr.rel (%p151) target = $region20
        $region19: #{tpu_custom_call.1} parent=15 // pred_region
          %p154 = scmp.lt.s32.totalorder %s19, 1
          %s155 = scalar_select %p154, %s19, 1
          %s156 = smul.addr %s155, 4
          %s157 = smul.addr %s156, 8
          %s158 = scalar_lea.vmem %s0, %s157
        $region20: #{tpu_custom_call.1} parent=15 // pred_fallthru
          _
        // Predicated region
        $region21: #{tpu_custom_call.1} parent=15 // pred_check
          %p159 = pneg %p70
        $region22: #{tpu_custom_call.1} parent=15 // pred_check_branch
          %161 = sbr.rel (%p159) target = $region24
        $region23: #{tpu_custom_call.1} parent=15 // pred_region
          %p162 = scmp.lt.s32.totalorder %s19, 1
          %s163 = scalar_select %p162, %s19, 1
          %s164 = smul.addr %s163, 4
          %s165 = smul.addr %s164, 8
          %s166 = scalar_lea.vmem %s1, %s165
        $region24: #{tpu_custom_call.1} parent=15 // pred_fallthru
          _
        // Predicated region
        $region25: #{tpu_custom_call.1} parent=15 // pred_check
          %p167 = pneg %p98
        $region26: #{tpu_custom_call.1} parent=15 // pred_check_branch
          %169 = sbr.rel (%p167) target = $region28
        $region27: #{tpu_custom_call.1} parent=15 // pred_region
          %s170 = smul.u32 2, %s20
          %p171 = scmp.lt.s32.totalorder %s19, 1
          %s172 = scalar_select %p171, %s19, 1
          %p173 = scmp.lt.s32.totalorder %s170, 1
          %s174 = scalar_select %p173, %s170, 1
          %s175 = smul.addr %s172, 8
          %s176 = sadd.s32 %s174, %s175
          %s177 = smul.addr %s176, 8
          %s178 = scalar_lea.vmem %s2, %s177
          %s179 = smul.u32 2, %s20
        $region28: #{tpu_custom_call.1} parent=15 // pred_fallthru
          _
      $region16: #{tpu_custom_call.1} parent=5 // pred_fallthru
        _
      %p180 = scmp.le.s32.totalorder 1, %s12
      %p181 = scmp.lt.s32.totalorder %s12, 3
      %p182 = pnand %p180, %p181
      %p183 = pneg %p182
      // Predicated region
      $region29: #{tpu_custom_call.1} parent=5 // pred_check
        _
      $region30: #{tpu_custom_call.1} parent=5 // pred_check_branch
        %185 = sbr.rel (%p182) target = $region32
      $region31: #{tpu_custom_call.1} parent=5 // pred_region
        %s186 = ssub.s32 %s12, 1
        %p187 = scmp.lt.s32.totalorder %s21, 1
        %s188 = scalar_select %p187, %s21, 1
        %s189 = smul.addr %s188, 4
        %s190 = smul.addr %s189, 8
        %s191 = scalar_lea.vmem %s0, %s190
        %p192 = pneg %p50
        %p193 = pneg %p47
        %p194 = scmp.lt.s32.totalorder %s21, 1
        %s195 = scalar_select %p194, %s21, 1
        %s196 = smul.addr %s195, 4
        %s197 = smul.addr %s196, 8
        %s198 = scalar_lea.vmem %s1, %s197
        %p199 = pneg %p76
        %p200 = pneg %p73
        %s201 = smul.u32 2, %s22
        %p202 = scmp.lt.s32.totalorder %s21, 1
        %s203 = scalar_select %p202, %s21, 1
        %p204 = scmp.lt.s32.totalorder %s201, 1
        %s205 = scalar_select %p204, %s201, 1
        %s206 = smul.addr %s203, 8
        %s207 = sadd.s32 %s205, %s206
        %s208 = smul.addr %s207, 8
        %s209 = scalar_lea.vmem %s2, %s208
        %p210 = pneg %p104
        %p211 = pneg %p101
        %p212 = pneg %p132
        %p213 = pneg %p129
        %s214 = sand.u32 %s119, 1
        %s215 = scalar_lea.sflag [#allocation3], %s214
        %s216 = sand.u32 %s119, 1
        %s217 = smul.addr %s216, 64
        %s218 = scalar_lea.vmem [#allocation2], %s217
        %p219 = scmp.lt.s32.totalorder %s21, 1
        %s220 = scalar_select %p219, %s21, 1
        %s221 = smul.addr %s220, 4
        %s222 = smul.addr %s221, 8
        %s223 = scalar_lea.vmem %s0, %s222
        %p224 = scmp.lt.s32.totalorder %s21, 1
        %s225 = scalar_select %p224, %s21, 1
        %s226 = smul.addr %s225, 4
        %s227 = smul.addr %s226, 8
        %s228 = scalar_lea.vmem %s1, %s227
        %s229 = smul.u32 2, %s22
        %p230 = scmp.lt.s32.totalorder %s21, 1
        %s231 = scalar_select %p230, %s21, 1
        %p232 = scmp.lt.s32.totalorder %s229, 1
        %s233 = scalar_select %p232, %s229, 1
        %s234 = smul.addr %s231, 8
        %s235 = sadd.s32 %s233, %s234
        %s236 = smul.addr %s235, 8
        %s237 = scalar_lea.vmem %s2, %s236
        %s238 = smul.u32 2, %s22
        %s239 = smul.u32 2, %s22
        %v240 = vld [vmem:[%s237] sm:$0xff]
        %v241 = vld [vmem:[%s237 + $0x8] sm:$0xff]
        %v242 = vld [vmem:[%s237 + $0x10] sm:$0xff]
        %v243 = vld [vmem:[%s237 + $0x18] sm:$0xff]
        %v244 = vld [vmem:[%s237 + $0x20] sm:$0xff]
        %v245 = vld [vmem:[%s237 + $0x28] sm:$0xff]
        %v246 = vld [vmem:[%s237 + $0x30] sm:$0xff]
        %v247 = vld [vmem:[%s237 + $0x38] sm:$0xff]
        %v248 = vld [vmem:[%s223] sm:$0xff]
        %v249 = vld [vmem:[%s223 + $0x8] sm:$0xff]
        %v250 = vld [vmem:[%s223 + $0x10] sm:$0xff]
        %v251 = vld [vmem:[%s223 + $0x18] sm:$0xff]
        %253 = vset.pattern.permute.xlu0 0
        %254 = vperm.xlu0 %253, %v248
        %v255 = vpop.permute.xlu0 %254
        %258 = vset.pattern.permute.xlu0 0
        %259 = vperm.xlu0 %258, %v249
        %v260 = vpop.permute.xlu0 %259
        %263 = vset.pattern.permute.xlu0 0
        %264 = vperm.xlu0 %263, %v250
        %v265 = vpop.permute.xlu0 %264
        %268 = vset.pattern.permute.xlu0 0
        %269 = vperm.xlu0 %268, %v251
        %v270 = vpop.permute.xlu0 %269
        %v272 = vmul.f32 %v240, %v255
        %v273 = vmul.f32 %v241, %v255
        %v274 = vmul.f32 %v242, %v260
        %v275 = vmul.f32 %v243, %v260
        %v276 = vmul.f32 %v244, %v265
        %v277 = vmul.f32 %v245, %v265
        %v278 = vmul.f32 %v246, %v270
        %v279 = vmul.f32 %v247, %v270
        %v280 = vld [vmem:[%s228] sm:$0xff]
        %v281 = vld [vmem:[%s228 + $0x8] sm:$0xff]
        %v282 = vld [vmem:[%s228 + $0x10] sm:$0xff]
        %v283 = vld [vmem:[%s228 + $0x18] sm:$0xff]
        %285 = vset.pattern.permute.xlu0 0
        %286 = vperm.xlu0 %285, %v280
        %v287 = vpop.permute.xlu0 %286
        %290 = vset.pattern.permute.xlu0 0
        %291 = vperm.xlu0 %290, %v281
        %v292 = vpop.permute.xlu0 %291
        %295 = vset.pattern.permute.xlu0 0
        %296 = vperm.xlu0 %295, %v282
        %v297 = vpop.permute.xlu0 %296
        %300 = vset.pattern.permute.xlu0 0
        %301 = vperm.xlu0 %300, %v283
        %v302 = vpop.permute.xlu0 %301
        %v304 = vadd.f32 %v272, %v287
        %v305 = vadd.f32 %v273, %v287
        %v306 = vadd.f32 %v274, %v292
        %v307 = vadd.f32 %v275, %v292
        %v308 = vadd.f32 %v276, %v297
        %v309 = vadd.f32 %v277, %v297
        %v310 = vadd.f32 %v278, %v302
        %v311 = vadd.f32 %v279, %v302
        %312 = vst [vmem:[%s218] sm:$0xff] %v304
        %313 = vst [vmem:[%s218 + $0x8] sm:$0xff] %v305
        %314 = vst [vmem:[%s218 + $0x10] sm:$0xff] %v306
        %315 = vst [vmem:[%s218 + $0x18] sm:$0xff] %v307
        %316 = vst [vmem:[%s218 + $0x20] sm:$0xff] %v308
        %317 = vst [vmem:[%s218 + $0x28] sm:$0xff] %v309
        %318 = vst [vmem:[%s218 + $0x30] sm:$0xff] %v310
        %319 = vst [vmem:[%s218 + $0x38] sm:$0xff] %v311
        %s320 = sand.u32 %s119, 1
        %s321 = scalar_lea.sflag [#allocation3], %s320
        %s322 = sand.u32 %s119, 1
        %s323 = smul.addr %s322, 64
        %s324 = scalar_lea.vmem [#allocation2], %s323
        // Predicated region
        $region33: #{tpu_custom_call.1} parent=31 // pred_check
          %p325 = pneg %p129
        $region34: #{tpu_custom_call.1} parent=31 // pred_check_branch
          %327 = sbr.rel (%p325) target = $region36
        $region35: #{tpu_custom_call.1} parent=31 // pred_region
          %s328 = smul.u32 2, %s22
          %s330 = ssub.s32 1024, 1024
          %331 = vsyncadd %s321, %s330
          %s332 = smul.addr %s21, 8
          %s333 = sadd.s32 %s328, %s332
          %s334 = smul.addr %s333, 128
          %s335 = scalar_lea.hbm %s3, %s334
          %s336 = sshll.u32 %s324, 4
          %s337 = int_to_ptr.vmem [resolvable:$true] %s336
          %342 = dma.vmem_to_hbm [thread:$0]  %s337, 1024, %s335, %s321, 256, 256, 16
        $region36: #{tpu_custom_call.1} parent=31 // pred_fallthru
          _
      $region32: #{tpu_custom_call.1} parent=5 // pred_fallthru
        _
      %p343 = scmp.le.s32.totalorder 2, %s12
      // Predicated region
      $region37: #{tpu_custom_call.1} parent=5 // pred_check
        %p344 = pneg %p343
      $region38: #{tpu_custom_call.1} parent=5 // pred_check_branch
        %346 = sbr.rel (%p344) target = $region40
      $region39: #{tpu_custom_call.1} parent=5 // pred_region
        %s347 = ssub.s32 %s12, 2
        // Predicated region
        $region41: #{tpu_custom_call.1} parent=39 // pred_check
          %p348 = pneg %p135
        $region42: #{tpu_custom_call.1} parent=39 // pred_check_branch
          %350 = sbr.rel (%p348) target = $region44
        $region43: #{tpu_custom_call.1} parent=39 // pred_region
          %s351 = sand.u32 %s120, 1
          %s352 = scalar_lea.sflag [#allocation3], %s351
          %s353 = sand.u32 %s120, 1
          %s354 = smul.addr %s353, 64
          %s355 = scalar_lea.vmem [#allocation2], %s354
          %356 = dma.done %s352, 1024
        $region44: #{tpu_custom_call.1} parent=39 // pred_fallthru
          _
      $region40: #{tpu_custom_call.1} parent=5 // pred_fallthru
        _
    $region6: #{tpu_custom_call.1} parent=1 // loop_footer
      %s16 = sadd.s32 1, %s12
    $region7: #{tpu_custom_call.1} parent=1 // loop_footer_branch
      %11 = sbr.rel target = $region3
    $region8: #{tpu_custom_call.1} parent=1 // loop_exit
      _
    %357 = vsyncpa [#allocation3], 1
    %s358 = scalar_lea.sflag [#allocation3], 1
    %359 = vsyncpa %s358, 1

</llo_original>
